<compile_context>
chip_gen: v7x
topology: tpu7x:2x2x1
jax: 0.10.0
libtpu: 0.0.40
codegen_flags: <defaults>
</compile_context>

<pallas_src>
import jax
import jax.numpy as jnp
from jax.experimental import pallas as pl
from jax.experimental.pallas import tpu as pltpu

H_IN = 256        # fc2 input features
H_MID = 256       # fc2 output / fc3 input features
H_OUT = 10        # fc3 output features (true)
H_OUT_PAD = 128   # fc3 output padded to one full 128-lane vreg
DROP_P = 0.5      # F.dropout default (training=True by default)
NEG_INF = -1e30   # finite "-inf" for padded logit lanes (avoids NaN)


def fc_output_kernel(x_ref, mask_ref, w2_ref, b2_ref, w3_ref, b3_ref, out_ref):
    # fc2: bf16 operands on the MXU, f32 accumulate.
    h = jnp.dot(x_ref[...], w2_ref[...], preferred_element_type=jnp.float32)
    h = h + b2_ref[...]
    # relu + dropout. The 1/(1-p) rescale is folded into w3, so the mask is just 0/1.
    h = jnp.maximum(h, 0.0) * mask_ref[...].astype(jnp.float32)
    # fc3 (N padded to 128 lanes; padded lanes carry a -1e30 bias).
    logits = jnp.dot(h.astype(jnp.bfloat16), w3_ref[...],
                     preferred_element_type=jnp.float32)
    logits = logits + b3_ref[...]
    # log_softmax over the feature axis; padded lanes contribute exp(-inf) = 0.
    m = jnp.max(logits, axis=1, keepdims=True)
    shifted = logits - m
    lse = jnp.log(jnp.sum(jnp.exp(shifted), axis=1, keepdims=True))
    out_ref[...] = shifted - lse


def _round_up(x, m):
    return ((x + m - 1) // m) * m


def fc_output_model(x, w2, b2, w3, b3, dropout_key, *, training=True, tb=256):
    """fc2 -> relu -> dropout(0.5) -> fc3 -> log_softmax as one Pallas call.

    x: (B, 256) f32/bf16; w2: (256,256); b2: (256,); w3: (256,10); b3: (10,)
    (weights are the transpose of torch's nn.Linear layout).
    """
    B = x.shape[0]
    TB = min(tb, _round_up(B, 8))          # batch tile (rows)
    Bp = _round_up(B, TB)                  # padded batch
    grid = (Bp // TB,)

    # Pad batch so every block is full; padded rows are sliced away below.
    x_p = jnp.zeros((Bp, H_IN), jnp.bfloat16).at[:B].set(x.astype(jnp.bfloat16))

    # Dropout keep-mask (host-side PRNG: unique per row, works in interpret mode).
    if training:
        keep = jax.random.bernoulli(dropout_key, 1.0 - DROP_P, (Bp, H_MID))
        mask = keep.astype(jnp.bfloat16)
        w3_eff = w3.astype(jnp.float32) * (1.0 / (1.0 - DROP_P))
    else:
        mask = jnp.ones((Bp, H_MID), jnp.bfloat16)
        w3_eff = w3.astype(jnp.float32)

    # Lane-dense fc3: zero-pad weight columns 10->128, bias padded lanes = -1e30.
    w3_pad = jnp.zeros((H_MID, H_OUT_PAD), jnp.bfloat16).at[:, :H_OUT].set(
        w3_eff.astype(jnp.bfloat16))
    b3_pad = jnp.full((1, H_OUT_PAD), NEG_INF, jnp.float32).at[:, :H_OUT].set(
        b3.reshape(1, H_OUT).astype(jnp.float32))

    w2_bf = w2.astype(jnp.bfloat16)
    b2_f = b2.reshape(1, H_MID).astype(jnp.float32)

    flops = 2 * Bp * (H_IN * H_MID + H_MID * H_OUT_PAD)
    bytes_accessed = (x_p.size * 2 + mask.size * 2 + w2_bf.size * 2 + b2_f.size * 4
                      + w3_pad.size * 2 + b3_pad.size * 4 + Bp * H_OUT_PAD * 4)
    cost = pl.CostEstimate(flops=flops,
                           transcendentals=Bp * H_OUT_PAD,
                           bytes_accessed=bytes_accessed)

    def row_spec(cols):      # tiled over the batch grid axis
        return pl.BlockSpec((TB, cols), lambda i: (i, 0))

    def res_spec(r, c):      # grid-resident (weights / biases)
        return pl.BlockSpec((r, c), lambda i: (0, 0))

    out = pl.pallas_call(
        fc_output_kernel,
        out_shape=jax.ShapeDtypeStruct((Bp, H_OUT_PAD), jnp.float32),
        grid=grid,
        in_specs=[
            row_spec(H_IN),              # x tile
            row_spec(H_MID),             # dropout mask tile
            res_spec(H_IN, H_MID),       # w2
            res_spec(1, H_MID),          # b2
            res_spec(H_MID, H_OUT_PAD),  # w3 (padded, dropout scale folded in)
            res_spec(1, H_OUT_PAD),      # b3 (padded with -1e30)
        ],
        out_specs=row_spec(H_OUT_PAD),
        compiler_params=pltpu.CompilerParams(
            dimension_semantics=("parallel",)),
        cost_estimate=cost,
    )(x_p, mask, w2_bf, b2_f, w3_pad, b3_pad)

    return out[:B, :H_OUT]


def init_params(key):
    # Deterministic init mimicking nn.Linear: U(-1/sqrt(fan_in), 1/sqrt(fan_in)).
    k1, k2, k3, k4 = jax.random.split(key, 4)
    lim2 = 1.0 / jnp.sqrt(float(H_IN))
    lim3 = 1.0 / jnp.sqrt(float(H_MID))
    w2 = jax.random.uniform(k1, (H_IN, H_MID), jnp.float32, -lim2, lim2)
    b2 = jax.random.uniform(k2, (H_MID,), jnp.float32, -lim2, lim2)
    w3 = jax.random.uniform(k3, (H_MID, H_OUT), jnp.float32, -lim3, lim3)
    b3 = jax.random.uniform(k4, (H_OUT,), jnp.float32, -lim3, lim3)
    return w2, b2, w3, b3


if __name__ == "__main__":
    key = jax.random.PRNGKey(0)
    kx, kp, kd = jax.random.split(key, 3)
    B = 8
    x = jax.random.normal(kx, (B, H_IN), jnp.float32)
    w2, b2, w3, b3 = init_params(kp)

    out = fc_output_model(x, w2, b2, w3, b3, kd)
    out = jax.block_until_ready(out)

    assert out.shape == (B, H_OUT)
    # log_softmax rows should sum to 1 after exp (padded lanes excluded by the slice).
    row_sums = jnp.exp(out).sum(axis=1)
    assert jnp.allclose(row_sums, 1.0, atol=1e-3), row_sums
    print("KERNEL_OK")
</pallas_src>

<mosaic_0001>
module attributes {stable_mosaic.version = 11 : i64} {
  func.func @fc_output_kernel(%arg0: i32, %arg1: memref<8x256xbf16, #tpu.memory_space<vmem>>, %arg2: memref<8x256xbf16, #tpu.memory_space<vmem>>, %arg3: memref<256x256xbf16, #tpu.memory_space<vmem>>, %arg4: memref<1x256xf32, #tpu.memory_space<vmem>>, %arg5: memref<256x128xbf16, #tpu.memory_space<vmem>>, %arg6: memref<1x128xf32, #tpu.memory_space<vmem>>, %arg7: memref<8x128xf32, #tpu.memory_space<vmem>>) attributes {dimension_semantics = [#tpu.dimension_semantics<parallel>], iteration_bounds = array<i64: 1>, scalar_prefetch = 0 : i64, scratch_operands = 0 : i64, tpu.core_type = #tpu.core_type<tc>, window_params = [{transform_indices = @transform_0, window_bounds = array<i64: 8, 256>}, {transform_indices = @transform_1, window_bounds = array<i64: 8, 256>}, {pipeline_mode = #tpu.pipeline_mode<synchronous>, transform_indices = @transform_2, window_bounds = array<i64: 256, 256>}, {pipeline_mode = #tpu.pipeline_mode<synchronous>, transform_indices = @transform_3, window_bounds = array<i64: 1, 256>}, {pipeline_mode = #tpu.pipeline_mode<synchronous>, transform_indices = @transform_4, window_bounds = array<i64: 256, 128>}, {pipeline_mode = #tpu.pipeline_mode<synchronous>, transform_indices = @transform_5, window_bounds = array<i64: 1, 128>}, {transform_indices = @transform_6, window_bounds = array<i64: 8, 128>}]} {
    %c0 = arith.constant 0 : index
    %c0_0 = arith.constant 0 : index
    %0 = vector.load %arg1[%c0, %c0_0] : memref<8x256xbf16, #tpu.memory_space<vmem>>, vector<8x256xbf16>
    %c0_1 = arith.constant 0 : index
    %c0_2 = arith.constant 0 : index
    %1 = vector.load %arg3[%c0_1, %c0_2] : memref<256x256xbf16, #tpu.memory_space<vmem>>, vector<256x256xbf16>
    %cst = arith.constant dense<0.000000e+00> : vector<8x256xf32>
    %2 = tpu.matmul %0, %1, %cst {dimension_numbers = #tpu.dot_dimension_numbers<[1], [0], [0], [1], [0, 0, 1, 1], [], []>} : vector<8x256xbf16>, vector<256x256xbf16>, vector<8x256xf32> -> vector<8x256xf32>
    %c0_3 = arith.constant 0 : index
    %c0_4 = arith.constant 0 : index
    %3 = vector.load %arg4[%c0_3, %c0_4] : memref<1x256xf32, #tpu.memory_space<vmem>>, vector<1x256xf32>
    %4 = vector.broadcast %3 : vector<1x256xf32> to vector<8x256xf32>
    %5 = arith.addf %2, %4 : vector<8x256xf32>
    %cst_5 = arith.constant 0.000000e+00 : f32
    %6 = vector.broadcast %cst_5 : f32 to vector<8x256xf32>
    %7 = arith.maximumf %5, %6 : vector<8x256xf32>
    %c0_6 = arith.constant 0 : index
    %c0_7 = arith.constant 0 : index
    %8 = vector.load %arg2[%c0_6, %c0_7] : memref<8x256xbf16, #tpu.memory_space<vmem>>, vector<8x256xbf16>
    %9 = arith.extf %8 : vector<8x256xbf16> to vector<8x256xf32>
    %10 = arith.mulf %7, %9 : vector<8x256xf32>
    %11 = arith.truncf %10 : vector<8x256xf32> to vector<8x256xbf16>
    %c0_8 = arith.constant 0 : index
    %c0_9 = arith.constant 0 : index
    %12 = vector.load %arg5[%c0_8, %c0_9] : memref<256x128xbf16, #tpu.memory_space<vmem>>, vector<256x128xbf16>
    %cst_10 = arith.constant dense<0.000000e+00> : vector<8x128xf32>
    %13 = tpu.matmul %11, %12, %cst_10 {dimension_numbers = #tpu.dot_dimension_numbers<[1], [0], [0], [1], [0, 0, 1, 1], [], []>} : vector<8x256xbf16>, vector<256x128xbf16>, vector<8x128xf32> -> vector<8x128xf32>
    %c0_11 = arith.constant 0 : index
    %c0_12 = arith.constant 0 : index
    %14 = vector.load %arg6[%c0_11, %c0_12] : memref<1x128xf32, #tpu.memory_space<vmem>>, vector<1x128xf32>
    %15 = vector.broadcast %14 : vector<1x128xf32> to vector<8x128xf32>
    %16 = arith.addf %13, %15 : vector<8x128xf32>
    %cst_13 = arith.constant dense<0xFF800000> : vector<8xf32>
    %17 = vector.multi_reduction <maximumf>, %16, %cst_13 [1] : vector<8x128xf32> to vector<8xf32>
    %18 = vector.shape_cast %17 : vector<8xf32> to vector<8x1xf32>
    %19 = vector.broadcast %18 : vector<8x1xf32> to vector<8x128xf32>
    %20 = arith.subf %16, %19 : vector<8x128xf32>
    %21 = math.exp %20 : vector<8x128xf32>
    %cst_14 = arith.constant dense<0.000000e+00> : vector<8xf32>
    %22 = vector.multi_reduction <add>, %21, %cst_14 [1] : vector<8x128xf32> to vector<8xf32>
    %23 = vector.shape_cast %22 : vector<8xf32> to vector<8x1xf32>
    %24 = math.log %23 : vector<8x1xf32>
    %25 = vector.broadcast %24 : vector<8x1xf32> to vector<8x128xf32>
    %26 = arith.subf %20, %25 : vector<8x128xf32>
    %c0_15 = arith.constant 0 : index
    %c0_16 = arith.constant 0 : index
    %27 = vector.load %arg7[%c0_15, %c0_16] : memref<8x128xf32, #tpu.memory_space<vmem>>, vector<8x128xf32>
    tpu.vector_store %arg7[%c0_15, %c0_16], %26 {strides = array<i32>} : memref<8x128xf32, #tpu.memory_space<vmem>>, vector<8x128xf32>,
    return
  }
  func.func @transform_0(%arg0: i32) -> (i32, i32) {
    %c0_i32 = arith.constant 0 : i32
    %c0_i32_0 = arith.constant 0 : i32
    return %arg0, %c0_i32 : i32, i32
  }
  func.func @transform_1(%arg0: i32) -> (i32, i32) {
    %c0_i32 = arith.constant 0 : i32
    %c0_i32_0 = arith.constant 0 : i32
    return %arg0, %c0_i32 : i32, i32
  }
  func.func @transform_2(%arg0: i32) -> (i32, i32) {
    %c0_i32 = arith.constant 0 : i32
    %c0_i32_0 = arith.constant 0 : i32
    %c0_i32_1 = arith.constant 0 : i32
    return %c0_i32, %c0_i32_0 : i32, i32
  }
  func.func @transform_3(%arg0: i32) -> (i32, i32) {
    %c0_i32 = arith.constant 0 : i32
    %c0_i32_0 = arith.constant 0 : i32
    %c0_i32_1 = arith.constant 0 : i32
    return %c0_i32, %c0_i32_0 : i32, i32
  }
  func.func @transform_4(%arg0: i32) -> (i32, i32) {
    %c0_i32 = arith.constant 0 : i32
    %c0_i32_0 = arith.constant 0 : i32
    %c0_i32_1 = arith.constant 0 : i32
    return %c0_i32, %c0_i32_0 : i32, i32
  }
  func.func @transform_5(%arg0: i32) -> (i32, i32) {
    %c0_i32 = arith.constant 0 : i32
    %c0_i32_0 = arith.constant 0 : i32
    %c0_i32_1 = arith.constant 0 : i32
    return %c0_i32, %c0_i32_0 : i32, i32
  }
  func.func @transform_6(%arg0: i32) -> (i32, i32) {
    %c0_i32 = arith.constant 0 : i32
    %c0_i32_0 = arith.constant 0 : i32
    return %arg0, %c0_i32 : i32, i32
  }
}

</mosaic_0001>

<llo_original>
// kernel: tpu_custom_call.1
$region0: #{tpu_custom_call.1}
  #allocation0 [shape = 'u32[]', space=smem, size = 0x4, offset = 0x4, fixed_abs, tag = 'smem constant byte address 0x4 - core index']
  #allocation1 [shape = 'u32[144,128]{1,0:T(1,128)}', space=vmem, size = 0x12000, scoped, tag = 'internal scratch']
  %s0 = inlined_call_operand.hbm [shape: bf16[8,256], index: 0, kind: input, shape index: {}]
  %s1 = inlined_call_operand.hbm [shape: bf16[8,256], index: 1, kind: input, shape index: {}]
  %s2 = inlined_call_operand.hbm [shape: bf16[256,256], index: 2, kind: input, shape index: {}]
  %s3 = inlined_call_operand.vmem [shape: f32[1,256], index: 3, kind: input, shape index: {}]
  %s4 = inlined_call_operand.hbm [shape: bf16[256,128], index: 4, kind: input, shape index: {}]
  %s5 = inlined_call_operand.vmem [shape: f32[1,128], index: 5, kind: input, shape index: {}]
  %s6 = inlined_call_operand.hbm [shape: f32[8,128], index: 6, kind: output, shape index: {}]
  %s7 = sld [smem:[#allocation0]]
  $region50: #{tpu_custom_call.1} parent=0
    _
  %s9 = ssub.s32 1, %s7
  %s10 = scalar_select 0, %s9, %s7
  $region1: #{tpu_custom_call.1} parent=0
    #allocation2 [shape = 'u8[4096]{0}', space=vmem, size = 0x1000, scoped, tag = 'input window, operand 0, single buffered']
    #allocation3 [shape = 's32[1]{0}', space=sflag, size = 0x4, scoped, tag = 'scoped memory for tpu_custom_call.1']
    #allocation4 [shape = 's32[1]{0}', space=sflag, size = 0x4, scoped, tag = 'scoped memory for tpu_custom_call.1']
    #allocation5 [shape = 'u8[4096]{0}', space=vmem, size = 0x1000, scoped, tag = 'input window, operand 1, single buffered']
    #allocation6 [shape = 's32[1]{0}', space=sflag, size = 0x4, scoped, tag = 'scoped memory for tpu_custom_call.1']
    #allocation7 [shape = 'u8[131072]{0}', space=vmem, size = 0x20000, scoped, tag = 'input window, operand 2, single buffered']
    #allocation8 [shape = 'u8[65536]{0}', space=vmem, size = 0x10000, scoped, tag = 'input window, operand 4, single buffered']
    #allocation9 [shape = 's32[1]{0}', space=sflag, size = 0x4, scoped, tag = 'scoped memory for tpu_custom_call.1']
    #allocation10 [shape = 'u8[4096]{0}', space=vmem, size = 0x1000, scoped, tag = 'output window, operand 0, single buffered']
    %11 = vsyncpa [#allocation3], 0
    %12 = vsyncpa [#allocation6], 0
    %13 = vsyncpa [#allocation9], 0
    %14 = vsyncpa [#allocation4], 0
    // Predicated region
    $region2: #{tpu_custom_call.1} parent=1 // pred_check
      _
    $region3: #{tpu_custom_call.1} parent=1 // pred_check_branch
      %16 = sbr.rel (0) target = $region5
    $region4: #{tpu_custom_call.1} parent=1 // pred_region
      %s18 = ssub.s32 128, 128
      %19 = vsyncadd [#allocation3], %s18
      %s21 = sshll.u32 [#allocation2], 4
      %s22 = int_to_ptr.vmem [resolvable:$true] %s21
      %24 = dma.hbm_to_vmem [thread:$0]  %s0, 128, %s22, [#allocation3]
    $region5: #{tpu_custom_call.1} parent=1 // pred_fallthru
      _
    // Predicated region
    $region6: #{tpu_custom_call.1} parent=1 // pred_check
      _
    $region7: #{tpu_custom_call.1} parent=1 // pred_check_branch
      %26 = sbr.rel (0) target = $region9
    $region8: #{tpu_custom_call.1} parent=1 // pred_region
      %s28 = ssub.s32 128, 128
      %29 = vsyncadd [#allocation6], %s28
      %s31 = sshll.u32 [#allocation5], 4
      %s32 = int_to_ptr.vmem [resolvable:$true] %s31
      %34 = dma.hbm_to_vmem [thread:$0]  %s1, 128, %s32, [#allocation6]
    $region9: #{tpu_custom_call.1} parent=1 // pred_fallthru
      _
    // Predicated region
    $region10: #{tpu_custom_call.1} parent=1 // pred_check
      _
    $region11: #{tpu_custom_call.1} parent=1 // pred_check_branch
      %36 = sbr.rel (0) target = $region13
    $region12: #{tpu_custom_call.1} parent=1 // pred_region
      %s38 = ssub.s32 4096, 4096
      %39 = vsyncadd [#allocation6], %s38
      %s40 = sshll.u32 [#allocation7], 4
      %s41 = int_to_ptr.vmem [resolvable:$true] %s40
      %46 = dma.hbm_to_vmem [thread:$0]  %s2, 4096, %s41, [#allocation6], 128, 128, 8
    $region13: #{tpu_custom_call.1} parent=1 // pred_fallthru
      _
    // Predicated region
    $region14: #{tpu_custom_call.1} parent=1 // pred_check
      _
    $region15: #{tpu_custom_call.1} parent=1 // pred_check_branch
      %48 = sbr.rel (0) target = $region17
    $region16: #{tpu_custom_call.1} parent=1 // pred_region
      _
    $region17: #{tpu_custom_call.1} parent=1 // pred_fallthru
      _
    // Predicated region
    $region18: #{tpu_custom_call.1} parent=1 // pred_check
      _
    $region19: #{tpu_custom_call.1} parent=1 // pred_check_branch
      %50 = sbr.rel (0) target = $region21
    $region20: #{tpu_custom_call.1} parent=1 // pred_region
      %s52 = ssub.s32 2048, 2048
      %53 = vsyncadd [#allocation9], %s52
      %s54 = sshll.u32 [#allocation8], 4
      %s55 = int_to_ptr.vmem [resolvable:$true] %s54
      %60 = dma.hbm_to_vmem [thread:$0]  %s4, 2048, %s55, [#allocation9], 64, 64, 4
    $region21: #{tpu_custom_call.1} parent=1 // pred_fallthru
      _
    // Predicated region
    $region22: #{tpu_custom_call.1} parent=1 // pred_check
      _
    $region23: #{tpu_custom_call.1} parent=1 // pred_check_branch
      %62 = sbr.rel (0) target = $region25
    $region24: #{tpu_custom_call.1} parent=1 // pred_region
      _
    $region25: #{tpu_custom_call.1} parent=1 // pred_fallthru
      _
    // Predicated region
    $region26: #{tpu_custom_call.1} parent=1 // pred_check
      _
    $region27: #{tpu_custom_call.1} parent=1 // pred_check_branch
      %64 = sbr.rel (0) target = $region29
    $region28: #{tpu_custom_call.1} parent=1 // pred_region
      %65 = dma.done [#allocation3], 128
    $region29: #{tpu_custom_call.1} parent=1 // pred_fallthru
      _
    // Predicated region
    $region30: #{tpu_custom_call.1} parent=1 // pred_check
      _
    $region31: #{tpu_custom_call.1} parent=1 // pred_check_branch
      %67 = sbr.rel (0) target = $region33
    $region32: #{tpu_custom_call.1} parent=1 // pred_region
      %68 = dma.done [#allocation6], 128
    $region33: #{tpu_custom_call.1} parent=1 // pred_fallthru
      _
    // Predicated region
    $region34: #{tpu_custom_call.1} parent=1 // pred_check
      _
    $region35: #{tpu_custom_call.1} parent=1 // pred_check_branch
      %70 = sbr.rel (0) target = $region37
    $region36: #{tpu_custom_call.1} parent=1 // pred_region
      %71 = dma.done [#allocation6], 4096
    $region37: #{tpu_custom_call.1} parent=1 // pred_fallthru
      _
    // Predicated region
    $region38: #{tpu_custom_call.1} parent=1 // pred_check
      _
    $region39: #{tpu_custom_call.1} parent=1 // pred_check_branch
      %73 = sbr.rel (0) target = $region41
    $region40: #{tpu_custom_call.1} parent=1 // pred_region
      %74 = dma.done [#allocation9], 2048
    $region41: #{tpu_custom_call.1} parent=1 // pred_fallthru
      _
    %v76 = vld [vmem:[#allocation2] sm:$0xff]
    %v77 = vld [vmem:[#allocation7] sm:$0xff]
    %v78 = vld [vmem:[#allocation7 + $0x8] sm:$0xff]
    %v79 = vld [vmem:[#allocation7 + $0x10] sm:$0xff]
    %v80 = vld [vmem:[#allocation7 + $0x18] sm:$0xff]
    %v81 = vld [vmem:[#allocation7 + $0x20] sm:$0xff]
    %v82 = vld [vmem:[#allocation7 + $0x28] sm:$0xff]
    %v83 = vld [vmem:[#allocation7 + $0x30] sm:$0xff]
    %v84 = vld [vmem:[#allocation7 + $0x38] sm:$0xff]
    %v85 = vld [vmem:[#allocation7 + $0x40] sm:$0xff]
    %v86 = vld [vmem:[#allocation7 + $0x48] sm:$0xff]
    %v87 = vld [vmem:[#allocation7 + $0x50] sm:$0xff]
    %v88 = vld [vmem:[#allocation7 + $0x58] sm:$0xff]
    %v89 = vld [vmem:[#allocation7 + $0x60] sm:$0xff]
    %v90 = vld [vmem:[#allocation7 + $0x68] sm:$0xff]
    %v91 = vld [vmem:[#allocation7 + $0x70] sm:$0xff]
    %v92 = vld [vmem:[#allocation7 + $0x78] sm:$0xff]
    %v93 = vld [vmem:[#allocation7 + $0x80] sm:$0xff]
    %v94 = vld [vmem:[#allocation7 + $0x88] sm:$0xff]
    %v95 = vld [vmem:[#allocation7 + $0x90] sm:$0xff]
    %v96 = vld [vmem:[#allocation7 + $0x98] sm:$0xff]
    %v97 = vld [vmem:[#allocation7 + $0xa0] sm:$0xff]
    %v98 = vld [vmem:[#allocation7 + $0xa8] sm:$0xff]
    %v99 = vld [vmem:[#allocation7 + $0xb0] sm:$0xff]
    %v100 = vld [vmem:[#allocation7 + $0xb8] sm:$0xff]
    %v101 = vld [vmem:[#allocation7 + $0xc0] sm:$0xff]
    %v102 = vld [vmem:[#allocation7 + $0xc8] sm:$0xff]
    %v103 = vld [vmem:[#allocation7 + $0xd0] sm:$0xff]
    %v104 = vld [vmem:[#allocation7 + $0xd8] sm:$0xff]
    %v105 = vld [vmem:[#allocation7 + $0xe0] sm:$0xff]
    %v106 = vld [vmem:[#allocation7 + $0xe8] sm:$0xff]
    %v107 = vld [vmem:[#allocation7 + $0xf0] sm:$0xff]
    %v108 = vld [vmem:[#allocation7 + $0xf8] sm:$0xff]
    %v109 = vld [vmem:[%s3] sm:$0x3]
    %v111 = vlaneseq
    %v112 = vshrl.u32 %v111, 7
    %v113 = vsub.s32 0, %v112
    %v114 = vrot.slane %v109, %v113
    %v115 = vlaneseq
    %v116 = vshrl.u32 %v115, 7
    %v117 = vsub.s32 1, %v116
    %v118 = vrot.slane %v109, %v117
    %v122 = vunpack.c.l.b16 %v76
    %v123 = vunpack.c.h.b16 %v76
    %v124 = vpack.c.b16 %v122, %v122
    %v125 = vpack.c.b16 %v123, %v123
    %v160 = vunpack.c.l.b16 %v77
    %v161 = vunpack.c.h.b16 %v77
    %v162 = vunpack.c.l.b16 %v78
    %v163 = vunpack.c.h.b16 %v78
    %v164 = vunpack.c.l.b16 %v79
    %v165 = vunpack.c.h.b16 %v79
    %v166 = vunpack.c.l.b16 %v80
    %v167 = vunpack.c.h.b16 %v80
    %v168 = vunpack.c.l.b16 %v81
    %v169 = vunpack.c.h.b16 %v81
    %v170 = vunpack.c.l.b16 %v82
    %v171 = vunpack.c.h.b16 %v82
    %v172 = vunpack.c.l.b16 %v83
    %v173 = vunpack.c.h.b16 %v83
    %v174 = vunpack.c.l.b16 %v84
    %v175 = vunpack.c.h.b16 %v84
    %v176 = vunpack.c.l.b16 %v85
    %v177 = vunpack.c.h.b16 %v85
    %v178 = vunpack.c.l.b16 %v86
    %v179 = vunpack.c.h.b16 %v86
    %v180 = vunpack.c.l.b16 %v87
    %v181 = vunpack.c.h.b16 %v87
    %v182 = vunpack.c.l.b16 %v88
    %v183 = vunpack.c.h.b16 %v88
    %v184 = vunpack.c.l.b16 %v89
    %v185 = vunpack.c.h.b16 %v89
    %v186 = vunpack.c.l.b16 %v90
    %v187 = vunpack.c.h.b16 %v90
    %v188 = vunpack.c.l.b16 %v91
    %v189 = vunpack.c.h.b16 %v91
    %v190 = vunpack.c.l.b16 %v92
    %v191 = vunpack.c.h.b16 %v92
    %v192 = vunpack.c.l.b16 %v93
    %v193 = vunpack.c.h.b16 %v93
    %v194 = vunpack.c.l.b16 %v94
    %v195 = vunpack.c.h.b16 %v94
    %v196 = vunpack.c.l.b16 %v95
    %v197 = vunpack.c.h.b16 %v95
    %v198 = vunpack.c.l.b16 %v96
    %v199 = vunpack.c.h.b16 %v96
    %v200 = vunpack.c.l.b16 %v97
    %v201 = vunpack.c.h.b16 %v97
    %v202 = vunpack.c.l.b16 %v98
    %v203 = vunpack.c.h.b16 %v98
    %v204 = vunpack.c.l.b16 %v99
    %v205 = vunpack.c.h.b16 %v99
    %v206 = vunpack.c.l.b16 %v100
    %v207 = vunpack.c.h.b16 %v100
    %v208 = vunpack.c.l.b16 %v101
    %v209 = vunpack.c.h.b16 %v101
    %v210 = vunpack.c.l.b16 %v102
    %v211 = vunpack.c.h.b16 %v102
    %v212 = vunpack.c.l.b16 %v103
    %v213 = vunpack.c.h.b16 %v103
    %v214 = vunpack.c.l.b16 %v104
    %v215 = vunpack.c.h.b16 %v104
    %v216 = vunpack.c.l.b16 %v105
    %v217 = vunpack.c.h.b16 %v105
    %v218 = vunpack.c.l.b16 %v106
    %v219 = vunpack.c.h.b16 %v106
    %v220 = vunpack.c.l.b16 %v107
    %v221 = vunpack.c.h.b16 %v107
    %v222 = vunpack.c.l.b16 %v108
    %v223 = vunpack.c.h.b16 %v108
    %v224 = vpack.c.b16 %v162, %v160
    %v225 = vpack.c.b16 %v163, %v161
    %v226 = vpack.c.b16 %v166, %v164
    %v227 = vpack.c.b16 %v167, %v165
    %v228 = vpack.c.b16 %v170, %v168
    %v229 = vpack.c.b16 %v171, %v169
    %v230 = vpack.c.b16 %v174, %v172
    %v231 = vpack.c.b16 %v175, %v173
    %v232 = vpack.c.b16 %v178, %v176
    %v233 = vpack.c.b16 %v179, %v177
    %v234 = vpack.c.b16 %v182, %v180
    %v235 = vpack.c.b16 %v183, %v181
    %v236 = vpack.c.b16 %v186, %v184
    %v237 = vpack.c.b16 %v187, %v185
    %v238 = vpack.c.b16 %v190, %v188
    %v239 = vpack.c.b16 %v191, %v189
    %v240 = vpack.c.b16 %v194, %v192
    %v241 = vpack.c.b16 %v195, %v193
    %v242 = vpack.c.b16 %v198, %v196
    %v243 = vpack.c.b16 %v199, %v197
    %v244 = vpack.c.b16 %v202, %v200
    %v245 = vpack.c.b16 %v203, %v201
    %v246 = vpack.c.b16 %v206, %v204
    %v247 = vpack.c.b16 %v207, %v205
    %v248 = vpack.c.b16 %v210, %v208
    %v249 = vpack.c.b16 %v211, %v209
    %v250 = vpack.c.b16 %v214, %v212
    %v251 = vpack.c.b16 %v215, %v213
    %v252 = vpack.c.b16 %v218, %v216
    %v253 = vpack.c.b16 %v219, %v217
    %v254 = vpack.c.b16 %v222, %v220
    %v255 = vpack.c.b16 %v223, %v221
    %288 = vmatprep.subr.bf16.mxu0 %v225
    %289 = vmatpush1.bf16.msra.mxu0 %v224
    %290 = vmatprep.subr.bf16.mxu0 %v227
    %291 = vmatpush1.bf16.msra.mxu0 %v226
    %292 = vmatprep.subr.bf16.mxu0 %v229
    %293 = vmatpush1.bf16.msra.mxu0 %v228
    %294 = vmatprep.subr.bf16.mxu0 %v231
    %295 = vmatpush1.bf16.msra.mxu0 %v230
    %296 = vmatprep.subr.bf16.mxu0 %v233
    %297 = vmatpush1.bf16.msra.mxu0 %v232
    %298 = vmatprep.subr.bf16.mxu0 %v235
    %299 = vmatpush1.bf16.msra.mxu0 %v234
    %300 = vmatprep.subr.bf16.mxu0 %v237
    %301 = vmatpush1.bf16.msra.mxu0 %v236
    %302 = vmatprep.subr.bf16.mxu0 %v239
    %303 = vmatpush1.bf16.msra.mxu0 %v238
    %304 = vmatprep.subr.bf16.mxu0 %v241
    %305 = vmatpush1.bf16.msra.mxu0 %v240
    %306 = vmatprep.subr.bf16.mxu0 %v243
    %307 = vmatpush1.bf16.msra.mxu0 %v242
    %308 = vmatprep.subr.bf16.mxu0 %v245
    %309 = vmatpush1.bf16.msra.mxu0 %v244
    %310 = vmatprep.subr.bf16.mxu0 %v247
    %311 = vmatpush1.bf16.msra.mxu0 %v246
    %312 = vmatprep.subr.bf16.mxu0 %v249
    %313 = vmatpush1.bf16.msra.mxu0 %v248
    %314 = vmatprep.subr.bf16.mxu0 %v251
    %315 = vmatpush1.bf16.msra.mxu0 %v250
    %316 = vmatprep.subr.bf16.mxu0 %v253
    %317 = vmatpush1.bf16.msra.mxu0 %v252
    %318 = vmatprep.subr.bf16.mxu0 %v255
    %319 = vmatpush1.bf16.msra.mxu0 %v254
    %320 = vmatprep.mubr.bf16.mxu0 %v125
    %321 = vmatmul.mubr.bf16.gmra.mrb[0].mxu0 %v124
    %v322 = vpop.f32.mrb[0].mxu0
    %v323 = vadd.f32 %v114, %v322
    %v324 = vpop.f32.mrb[0].mxu0
    %v325 = vadd.f32 %v118, %v324
    %v326 = vpop.f32.mrb[0].mxu0
    %v327 = vpop.f32.mrb[0].mxu0
    %328 = vdwg.mxu0
    %v329 = vmax.f32 %v323, 0.0
    %v330 = vmax.f32 %v325, 0.0
    %v331 = vld [vmem:[#allocation5] sm:$0xff]
    %v332 = vunpack.c.l.bf16 %v331
    %v333 = vunpack.c.h.bf16 %v331
    %v334 = vmul.f32 %v329, %v332
    %v335 = vmul.f32 %v330, %v333
    %v336 = vpack.c.bf16 %v334, %v334
    %v337 = vpack.c.bf16 %v335, %v335
    %v338 = vld [vmem:[#allocation8] sm:$0xf]
    %v339 = vld [vmem:[#allocation8 + $0x4] sm:$0xf]
    %v340 = vld [vmem:[#allocation8 + $0x8] sm:$0xf]
    %v341 = vld [vmem:[#allocation8 + $0xc] sm:$0xf]
    %v342 = vld [vmem:[#allocation8 + $0x10] sm:$0xf]
    %v343 = vld [vmem:[#allocation8 + $0x14] sm:$0xf]
    %v344 = vld [vmem:[#allocation8 + $0x18] sm:$0xf]
    %v345 = vld [vmem:[#allocation8 + $0x1c] sm:$0xf]
    %v346 = vld [vmem:[#allocation8 + $0x20] sm:$0xf]
    %v347 = vld [vmem:[#allocation8 + $0x24] sm:$0xf]
    %v348 = vld [vmem:[#allocation8 + $0x28] sm:$0xf]
    %v349 = vld [vmem:[#allocation8 + $0x2c] sm:$0xf]
    %v350 = vld [vmem:[#allocation8 + $0x30] sm:$0xf]
    %v351 = vld [vmem:[#allocation8 + $0x34] sm:$0xf]
    %v352 = vld [vmem:[#allocation8 + $0x38] sm:$0xf]
    %v353 = vld [vmem:[#allocation8 + $0x3c] sm:$0xf]
    %v354 = vld [vmem:[#allocation8 + $0x40] sm:$0xf]
    %v355 = vld [vmem:[#allocation8 + $0x44] sm:$0xf]
    %v356 = vld [vmem:[#allocation8 + $0x48] sm:$0xf]
    %v357 = vld [vmem:[#allocation8 + $0x4c] sm:$0xf]
    %v358 = vld [vmem:[#allocation8 + $0x50] sm:$0xf]
    %v359 = vld [vmem:[#allocation8 + $0x54] sm:$0xf]
    %v360 = vld [vmem:[#allocation8 + $0x58] sm:$0xf]
    %v361 = vld [vmem:[#allocation8 + $0x5c] sm:$0xf]
    %v362 = vld [vmem:[#allocation8 + $0x60] sm:$0xf]
    %v363 = vld [vmem:[#allocation8 + $0x64] sm:$0xf]
    %v364 = vld [vmem:[#allocation8 + $0x68] sm:$0xf]
    %v365 = vld [vmem:[#allocation8 + $0x6c] sm:$0xf]
    %v366 = vld [vmem:[#allocation8 + $0x70] sm:$0xf]
    %v367 = vld [vmem:[#allocation8 + $0x74] sm:$0xf]
    %v368 = vld [vmem:[#allocation8 + $0x78] sm:$0xf]
    %v369 = vld [vmem:[#allocation8 + $0x7c] sm:$0xf]
    %v370 = vld [vmem:[%s5] sm:$0x1]
    %v372 = vlaneseq
    %v373 = vshrl.u32 %v372, 7
    %v374 = vsub.s32 0, %v373
    %v375 = vrot.slane %v370, %v374
    %v409 = vunpack.c.l.b16 %v338
    %v410 = vunpack.c.l.b16 %v339
    %v411 = vunpack.c.l.b16 %v340
    %v412 = vunpack.c.l.b16 %v341
    %v413 = vunpack.c.l.b16 %v342
    %v414 = vunpack.c.l.b16 %v343
    %v415 = vunpack.c.l.b16 %v344
    %v416 = vunpack.c.l.b16 %v345
    %v417 = vunpack.c.l.b16 %v346
    %v418 = vunpack.c.l.b16 %v347
    %v419 = vunpack.c.l.b16 %v348
    %v420 = vunpack.c.l.b16 %v349
    %v421 = vunpack.c.l.b16 %v350
    %v422 = vunpack.c.l.b16 %v351
    %v423 = vunpack.c.l.b16 %v352
    %v424 = vunpack.c.l.b16 %v353
    %v425 = vunpack.c.l.b16 %v354
    %v426 = vunpack.c.l.b16 %v355
    %v427 = vunpack.c.l.b16 %v356
    %v428 = vunpack.c.l.b16 %v357
    %v429 = vunpack.c.l.b16 %v358
    %v430 = vunpack.c.l.b16 %v359
    %v431 = vunpack.c.l.b16 %v360
    %v432 = vunpack.c.l.b16 %v361
    %v433 = vunpack.c.l.b16 %v362
    %v434 = vunpack.c.l.b16 %v363
    %v435 = vunpack.c.l.b16 %v364
    %v436 = vunpack.c.l.b16 %v365
    %v437 = vunpack.c.l.b16 %v366
    %v438 = vunpack.c.l.b16 %v367
    %v439 = vunpack.c.l.b16 %v368
    %v440 = vunpack.c.l.b16 %v369
    %v441 = vpack.c.b16 %v410, %v409
    %v442 = vpack.c.b16 %v412, %v411
    %v443 = vpack.c.b16 %v414, %v413
    %v444 = vpack.c.b16 %v416, %v415
    %v445 = vpack.c.b16 %v418, %v417
    %v446 = vpack.c.b16 %v420, %v419
    %v447 = vpack.c.b16 %v422, %v421
    %v448 = vpack.c.b16 %v424, %v423
    %v449 = vpack.c.b16 %v426, %v425
    %v450 = vpack.c.b16 %v428, %v427
    %v451 = vpack.c.b16 %v430, %v429
    %v452 = vpack.c.b16 %v432, %v431
    %v453 = vpack.c.b16 %v434, %v433
    %v454 = vpack.c.b16 %v436, %v435
    %v455 = vpack.c.b16 %v438, %v437
    %v456 = vpack.c.b16 %v440, %v439
    %473 = vmatprep.subr.bf16.mxu0 0
    %474 = vmatpush1.bf16.msra.mxu0 %v441
    %475 = vmatprep.subr.bf16.mxu0 0
    %476 = vmatpush1.bf16.msra.mxu0 %v442
    %477 = vmatprep.subr.bf16.mxu0 0
    %478 = vmatpush1.bf16.msra.mxu0 %v443
    %479 = vmatprep.subr.bf16.mxu0 0
    %480 = vmatpush1.bf16.msra.mxu0 %v444
    %481 = vmatprep.subr.bf16.mxu0 0
    %482 = vmatpush1.bf16.msra.mxu0 %v445
    %483 = vmatprep.subr.bf16.mxu0 0
    %484 = vmatpush1.bf16.msra.mxu0 %v446
    %485 = vmatprep.subr.bf16.mxu0 0
    %486 = vmatpush1.bf16.msra.mxu0 %v447
    %487 = vmatprep.subr.bf16.mxu0 0
    %488 = vmatpush1.bf16.msra.mxu0 %v448
    %489 = vmatprep.subr.bf16.mxu0 0
    %490 = vmatpush1.bf16.msra.mxu0 %v449
    %491 = vmatprep.subr.bf16.mxu0 0
    %492 = vmatpush1.bf16.msra.mxu0 %v450
    %493 = vmatprep.subr.bf16.mxu0 0
    %494 = vmatpush1.bf16.msra.mxu0 %v451
    %495 = vmatprep.subr.bf16.mxu0 0
    %496 = vmatpush1.bf16.msra.mxu0 %v452
    %497 = vmatprep.subr.bf16.mxu0 0
    %498 = vmatpush1.bf16.msra.mxu0 %v453
    %499 = vmatprep.subr.bf16.mxu0 0
    %500 = vmatpush1.bf16.msra.mxu0 %v454
    %501 = vmatprep.subr.bf16.mxu0 0
    %502 = vmatpush1.bf16.msra.mxu0 %v455
    %503 = vmatprep.subr.bf16.mxu0 0
    %504 = vmatpush1.bf16.msra.mxu0 %v456
    %505 = vmatprep.mubr.bf16.mxu0 %v337
    %506 = vmatmul.mubr.bf16.gmra.mrb[0].mxu0 %v336
    %v507 = vpop.f32.mrb[0].mxu0
    %v508 = vadd.f32 %v375, %v507
    %v509 = vpop.f32.mrb[0].mxu0
    %v510 = vpop.f32.mrb[0].mxu0
    %v511 = vpop.f32.mrb[0].mxu0
    %512 = vdwg.mxu0
    %513 = vmax.xlane.f32.xlu0 %v508
    %v514 = vpop.xlane.xlu0 %513
    %v515 = vsub.f32 %v508, %v514
    %v516 = vmul.f32 %v515, 1.442695
    %v517 = vpow.pop %v516
    %518 = vadd.xlane.f32.xlu0 %v517
    %v519 = vpop.xlane.xlu0 %518
    %v520 = vlog2.pop %v519
    %v521 = vmul.f32 %v520, 0.6931472
    %v522 = vsub.f32 %v515, %v521
    %523 = vst [vmem:[#allocation10] sm:$0xff] %v522
    // Predicated region
    $region42: #{tpu_custom_call.1} parent=1 // pred_check
      _
    $region43: #{tpu_custom_call.1} parent=1 // pred_check_branch
      %525 = sbr.rel (0) target = $region45
    $region44: #{tpu_custom_call.1} parent=1 // pred_region
      %s527 = ssub.s32 128, 128
      %528 = vsyncadd [#allocation4], %s527
      %s530 = sshll.u32 [#allocation10], 4
      %s531 = int_to_ptr.vmem [resolvable:$true] %s530
      %533 = dma.vmem_to_hbm [thread:$0]  %s531, 128, %s6, [#allocation4]
    $region45: #{tpu_custom_call.1} parent=1 // pred_fallthru
      _
    // Predicated region
    $region46: #{tpu_custom_call.1} parent=1 // pred_check
      _
    $region47: #{tpu_custom_call.1} parent=1 // pred_check_branch
      %535 = sbr.rel (0) target = $region49
    $region48: #{tpu_custom_call.1} parent=1 // pred_region
      %536 = dma.done [#allocation4], 128
    $region49: #{tpu_custom_call.1} parent=1 // pred_fallthru
      _
    %537 = vsyncpa [#allocation3], 1
    %538 = vsyncpa [#allocation6], 1
    %539 = vsyncpa [#allocation9], 1
    %540 = vsyncpa [#allocation4], 1

</llo_original>
